<compile_context>
chip_gen: v7x
topology: tpu7x:2x2x1
jax: 0.10.0
libtpu: 0.0.40
codegen_flags: <defaults>
</compile_context>

<pallas_src>
import functools

import jax
import jax.numpy as jnp
from jax import lax
from jax.experimental import pallas as pl
from jax.experimental.pallas import tpu as pltpu


def _cdiv(a: int, b: int) -> int:
    return (a + b - 1) // b


def _round_up(n: int, m: int) -> int:
    return _cdiv(n, m) * m


def _vmem_policy():
    """Returns (per-step block-byte budget, scoped-VMEM limit to request or None)."""
    try:
        cap = int(pltpu.get_tpu_info().vmem_capacity_bytes)
        limit = min(cap // 2, 96 << 20)       # v5e/v6e: 64 MiB, v7x: 32 MiB
        return (2 * limit) // 5, limit        # 2x buffering + headroom stays under limit
    except Exception:
        # Conservative fallback: fits v5e's 16 MiB default scoped-VMEM limit.
        return 6 << 20, None


def _row_tiling(n_rows: int, per_row_bytes: int, sublane: int):
    """Row-tile size, grid length and the scoped-VMEM limit to request."""
    budget, limit = _vmem_policy()
    max_tr = max(sublane, (budget // max(per_row_bytes, 1)) // sublane * sublane)
    # Prefer >= 2 grid steps (v7x megacore sharding + pipeline overlap) and split
    # rows evenly so edge padding is bounded by < TR instead of ~TR.
    min_steps = 2 if n_rows > sublane else 1
    steps = max(min_steps, _cdiv(n_rows, max_tr))
    tr = _round_up(_cdiv(n_rows, steps), sublane)
    return tr, _cdiv(n_rows, tr), limit


def _compiler_params(limit):
    if limit is None:
        return pltpu.CompilerParams(dimension_semantics=("parallel",))
    return pltpu.CompilerParams(dimension_semantics=("parallel",),
                                vmem_limit_bytes=limit)


def _rows_kernel(x_ref, wb_ref, o_ref, *, kernel_size, out_w, step):
    """Contiguous-row path.

    x_ref:  (TR, L)     input rows in native dtype
    wb_ref: (TR, K+1)   per-row [w_0 .. w_{K-1}, beta - sum_k w_k]
    o_ref:  (TR, W)     output block (full lane extent; tail store is masked)
    """
    wb = wb_ref[...]
    if step == 1:
        xv = x_ref[...]
        if xv.dtype != jnp.float32:
            xv = xv.astype(jnp.float32)
        taps = [xv[:, k:k + out_w] for k in range(kernel_size)]
    else:
        taps = [x_ref[:, pl.ds(k, out_w, stride=step)].astype(jnp.float32)
                for k in range(kernel_size)]
    acc = wb[:, kernel_size:kernel_size + 1] + taps[0] * wb[:, 0:1]
    for k in range(1, kernel_size):                    # K is small & static -> unrolled
        acc = acc + taps[k] * wb[:, k:k + 1]
    o_ref[...] = jnp.maximum(acc, 0.0).astype(o_ref.dtype)


def _destrided_kernel(y_ref, wb_ref, o_ref, *, kernel_size):
    """Fallback path for step > 1 (windows de-strided once in XLA).

    y_ref: (K, TR, W) with y[k, r, t] = x[r, t*step + k]
    """
    wb = wb_ref[...]
    yv = y_ref[...]
    if yv.dtype != jnp.float32:
        yv = yv.astype(jnp.float32)
    acc = wb[:, kernel_size:kernel_size + 1] + yv[0] * wb[:, 0:1]
    for k in range(1, kernel_size):
        acc = acc + yv[k] * wb[:, k:k + 1]
    o_ref[...] = jnp.maximum(acc, 0.0).astype(o_ref.dtype)


def conv1d_always(x, weights, beta, *, kernel_size, step=1):
    """Forward of Conv1DAlwaysLayer. x: (B, C, L), weights: (C, K), beta: (C,)."""
    B, C, L = x.shape
    K = kernel_size
    W = (L - K) // step + 1
    R = B * C
    f32 = jnp.float32

    # Per-row parameter table [w_0 .. w_{K-1}, beta - sum_k w_k]  (tiny).
    w_f = weights.astype(f32)
    wb_c = jnp.concatenate(
        [w_f, beta.astype(f32)[:, None] - w_f.sum(-1, keepdims=True)], axis=-1)
    wb = jnp.tile(wb_c, (B, 1))                                   # (R, K+1)

    x2 = x.reshape(R, L)                                          # free; keep native dtype
    sub = 8 * max(1, 4 // x.dtype.itemsize)                       # sublane granularity (f32:8, bf16:16, i8:32)
    out_shape = jax.ShapeDtypeStruct((R, W), f32)

    def run_rows():
        per_row = L * x.dtype.itemsize + W * 4 + (K + 1) * 4
        tr, n_blocks, limit = _row_tiling(R, per_row, sub)
        # TODO(synk): for rows too long to fit VMEM even at tr == sub, additionally
        # tile the lane axis with a (K-1)*step halo instead of keeping the full
        # padded row resident in one block.
        kernel = functools.partial(_rows_kernel, kernel_size=K, out_w=W, step=step)
        return pl.pallas_call(
            kernel,
            out_shape=out_shape,
            grid=(n_blocks,),
            in_specs=[
                pl.BlockSpec((tr, L), lambda i: (i, 0)),
                pl.BlockSpec((tr, K + 1), lambda i: (i, 0)),
            ],
            out_specs=pl.BlockSpec((tr, W), lambda i: (i, 0)),
            compiler_params=_compiler_params(limit),
        )(x2, wb)

    def run_destrided():
        # De-stride once in XLA: y[k, r, t] = x[r, t*step + k]  -> (K, R, W).
        lim = (W - 1) * step + 1
        y = jnp.stack(
            [lax.slice(x2, (0, k), (R, k + lim), (1, step)) for k in range(K)], axis=0)
        per_row = K * W * x.dtype.itemsize + W * 4 + (K + 1) * 4
        tr, n_blocks, limit = _row_tiling(R, per_row, sub)
        kernel = functools.partial(_destrided_kernel, kernel_size=K)
        return pl.pallas_call(
            kernel,
            out_shape=out_shape,
            grid=(n_blocks,),
            in_specs=[
                pl.BlockSpec((K, tr, W), lambda i: (0, i, 0)),
                pl.BlockSpec((tr, K + 1), lambda i: (i, 0)),
            ],
            out_specs=pl.BlockSpec((tr, W), lambda i: (i, 0)),
            compiler_params=_compiler_params(limit),
        )(y, wb)

    if step == 1:
        out = run_rows()
    else:
        # Prefer in-kernel strided lane loads (no de-strided HBM copy of x); fall
        # back to the de-strided layout if this Mosaic build rejects lane strides.
        try:
            out = jax.block_until_ready(run_rows())
        except Exception:
            out = run_destrided()

    return out.reshape(B, C, W)


def _reference(x, weights, beta, kernel_size, step):
    # Pure-JAX mirror of the PyTorch forward, for correctness checking.
    idx = (jnp.arange((x.shape[-1] - kernel_size) // step + 1)[:, None] * step
           + jnp.arange(kernel_size)[None, :])
    windows = x[:, :, idx]                                      # (B, C, W, K)
    weighted = (1.0 - windows) * weights[None, :, None, :]      # (B, C, W, K)
    row_sums = beta[None, :, None] - weighted.sum(-1)           # (B, C, W)
    res = jnp.maximum(row_sums, 0.0)
    return jnp.where(res >= 0.0, res, 0.02 * res)


if __name__ == "__main__":
    B, C, L = 2, 4, 16
    K = 3

    key = jax.random.PRNGKey(0)
    kx, kw, kb = jax.random.split(key, 3)
    x = jax.random.normal(kx, (B, C, L), dtype=jnp.float32)
    weights = jax.random.normal(kw, (C, K), dtype=jnp.float32)   # nn.Parameter(randn(channels, kernel_size))
    beta = jax.random.normal(kb, (C,), dtype=jnp.float32)        # nn.Parameter(randn(channels))

    # step == 1 (module default)
    out1 = jax.block_until_ready(conv1d_always(x, weights, beta, kernel_size=K, step=1))
    ref1 = _reference(x, weights, beta, K, 1)
    assert out1.shape == (B, C, (L - K) // 1 + 1)
    assert jnp.allclose(out1, ref1, atol=1e-5, rtol=1e-5)

    # step > 1
    out2 = jax.block_until_ready(conv1d_always(x, weights, beta, kernel_size=K, step=2))
    ref2 = _reference(x, weights, beta, K, 2)
    assert out2.shape == (B, C, (L - K) // 2 + 1)
    assert jnp.allclose(out2, ref2, atol=1e-5, rtol=1e-5)

    print("KERNEL_OK")
</pallas_src>

<mosaic_0001>
module attributes {stable_mosaic.version = 11 : i64} {
  func.func @_rows_kernel(%arg0: i32, %arg1: memref<8x16xf32, #tpu.memory_space<vmem>>, %arg2: memref<8x4xf32, #tpu.memory_space<vmem>>, %arg3: memref<8x14xf32, #tpu.memory_space<vmem>>) attributes {dimension_semantics = [#tpu.dimension_semantics<parallel>], iteration_bounds = array<i64: 1>, scalar_prefetch = 0 : i64, scratch_operands = 0 : i64, tpu.core_type = #tpu.core_type<tc>, window_params = [{transform_indices = @transform_0, window_bounds = array<i64: 8, 16>}, {transform_indices = @transform_1, window_bounds = array<i64: 8, 4>}, {transform_indices = @transform_2, window_bounds = array<i64: 8, 14>}]} {
    %c0 = arith.constant 0 : index
    %c0_0 = arith.constant 0 : index
    %0 = vector.load %arg2[%c0, %c0_0] : memref<8x4xf32, #tpu.memory_space<vmem>>, vector<8x4xf32>
    %c0_1 = arith.constant 0 : index
    %c0_2 = arith.constant 0 : index
    %1 = vector.load %arg1[%c0_1, %c0_2] : memref<8x16xf32, #tpu.memory_space<vmem>>, vector<8x16xf32>
    %2 = vector.extract_strided_slice %1 {offsets = [0, 0], sizes = [8, 14], strides = [1, 1]} : vector<8x16xf32> to vector<8x14xf32>
    %3 = vector.extract_strided_slice %1 {offsets = [0, 1], sizes = [8, 14], strides = [1, 1]} : vector<8x16xf32> to vector<8x14xf32>
    %4 = vector.extract_strided_slice %1 {offsets = [0, 2], sizes = [8, 14], strides = [1, 1]} : vector<8x16xf32> to vector<8x14xf32>
    %5 = vector.extract_strided_slice %0 {offsets = [0, 3], sizes = [8, 1], strides = [1, 1]} : vector<8x4xf32> to vector<8x1xf32>
    %6 = vector.extract_strided_slice %0 {offsets = [0, 0], sizes = [8, 1], strides = [1, 1]} : vector<8x4xf32> to vector<8x1xf32>
    %7 = vector.broadcast %6 : vector<8x1xf32> to vector<8x14xf32>
    %8 = arith.mulf %2, %7 : vector<8x14xf32>
    %9 = vector.broadcast %5 : vector<8x1xf32> to vector<8x14xf32>
    %10 = arith.addf %9, %8 : vector<8x14xf32>
    %11 = vector.extract_strided_slice %0 {offsets = [0, 1], sizes = [8, 1], strides = [1, 1]} : vector<8x4xf32> to vector<8x1xf32>
    %12 = vector.broadcast %11 : vector<8x1xf32> to vector<8x14xf32>
    %13 = arith.mulf %3, %12 : vector<8x14xf32>
    %14 = arith.addf %10, %13 : vector<8x14xf32>
    %15 = vector.extract_strided_slice %0 {offsets = [0, 2], sizes = [8, 1], strides = [1, 1]} : vector<8x4xf32> to vector<8x1xf32>
    %16 = vector.broadcast %15 : vector<8x1xf32> to vector<8x14xf32>
    %17 = arith.mulf %4, %16 : vector<8x14xf32>
    %18 = arith.addf %14, %17 : vector<8x14xf32>
    %cst = arith.constant 0.000000e+00 : f32
    %19 = vector.broadcast %cst : f32 to vector<8x14xf32>
    %20 = arith.maximumf %18, %19 : vector<8x14xf32>
    %c0_3 = arith.constant 0 : index
    %c0_4 = arith.constant 0 : index
    %21 = vector.load %arg3[%c0_3, %c0_4] : memref<8x14xf32, #tpu.memory_space<vmem>>, vector<8x14xf32>
    tpu.vector_store %arg3[%c0_3, %c0_4], %20 {strides = array<i32>} : memref<8x14xf32, #tpu.memory_space<vmem>>, vector<8x14xf32>,
    return
  }
  func.func @transform_0(%arg0: i32) -> (i32, i32) {
    %c0_i32 = arith.constant 0 : i32
    %c0_i32_0 = arith.constant 0 : i32
    return %arg0, %c0_i32 : i32, i32
  }
  func.func @transform_1(%arg0: i32) -> (i32, i32) {
    %c0_i32 = arith.constant 0 : i32
    %c0_i32_0 = arith.constant 0 : i32
    return %arg0, %c0_i32 : i32, i32
  }
  func.func @transform_2(%arg0: i32) -> (i32, i32) {
    %c0_i32 = arith.constant 0 : i32
    %c0_i32_0 = arith.constant 0 : i32
    return %arg0, %c0_i32 : i32, i32
  }
}

</mosaic_0001>

<llo_original>
// kernel: tpu_custom_call.1
$region0: #{tpu_custom_call.1}
  #allocation0 [shape = 'u32[]', space=smem, size = 0x4, offset = 0x4, fixed_abs, tag = 'smem constant byte address 0x4 - core index']
  #allocation1 [shape = 'u32[144,128]{1,0:T(1,128)}', space=vmem, size = 0x12000, scoped, tag = 'internal scratch']
  %s0 = inlined_call_operand.vmem [shape: f32[8,16], index: 0, kind: input, shape index: {}]
  %s1 = inlined_call_operand.vmem [shape: f32[8,4], index: 1, kind: input, shape index: {}]
  %s2 = inlined_call_operand.hbm [shape: f32[8,14], index: 2, kind: output, shape index: {}]
  %s3 = sld [smem:[#allocation0]]
  $region18: #{tpu_custom_call.1} parent=0
    _
  %s5 = ssub.s32 1, %s3
  %s6 = scalar_select 0, %s5, %s3
  $region1: #{tpu_custom_call.1} parent=0
    #allocation2 [shape = 'u8[4096]{0}', space=vmem, size = 0x1000, scoped, tag = 'output window, operand 0, single buffered']
    #allocation3 [shape = 's32[1]{0}', space=sflag, size = 0x4, scoped, tag = 'scoped memory for tpu_custom_call.1']
    %7 = vsyncpa [#allocation3], 0
    // Predicated region
    $region2: #{tpu_custom_call.1} parent=1 // pred_check
      _
    $region3: #{tpu_custom_call.1} parent=1 // pred_check_branch
      %9 = sbr.rel (0) target = $region5
    $region4: #{tpu_custom_call.1} parent=1 // pred_region
      _
    $region5: #{tpu_custom_call.1} parent=1 // pred_fallthru
      _
    // Predicated region
    $region6: #{tpu_custom_call.1} parent=1 // pred_check
      _
    $region7: #{tpu_custom_call.1} parent=1 // pred_check_branch
      %11 = sbr.rel (0) target = $region9
    $region8: #{tpu_custom_call.1} parent=1 // pred_region
      _
    $region9: #{tpu_custom_call.1} parent=1 // pred_fallthru
      _
    %v12 = vld [vmem:[%s1] sm:$0xff]
    %v13 = vld [vmem:[%s0] sm:$0xff]
    %15 = vset.pattern.permute.xlu0 0
    %16 = vperm.xlu0 %15, %v12
    %v17 = vpop.permute.xlu0 %16
    %v19 = vmul.f32 %v13, %v17
    %20 = vset.pattern.permute.xlu0 3
    %21 = vperm.xlu0 %20, %v12
    %v22 = vpop.permute.xlu0 %21
    %v24 = vadd.f32 %v22, %v19
    %25 = vset.pattern.permute.xlu0 1
    %26 = vperm.xlu0 %25, %v12
    %v27 = vpop.permute.xlu0 %26
    %v29 = vmul.f32 %v13, %v27
    %31 = vrot.lane.b32.xlu0 %v29, 127
    %v32 = vpop.permute.xlu0 %31
    %v34 = vadd.f32 %v24, %v32
    %35 = vset.pattern.permute.xlu0 2
    %36 = vperm.xlu0 %35, %v12
    %v37 = vpop.permute.xlu0 %36
    %v39 = vmul.f32 %v13, %v37
    %41 = vrot.lane.b32.xlu0 %v39, 126
    %v42 = vpop.permute.xlu0 %41
    %v44 = vadd.f32 %v34, %v42
    %v45 = vmax.f32 %v44, 0.0
    %vm46 = vcmask 113664
    %47 = vst.msk [vmem:[#allocation2] sm:$0xff] %vm46, %v45
    // Predicated region
    $region10: #{tpu_custom_call.1} parent=1 // pred_check
      _
    $region11: #{tpu_custom_call.1} parent=1 // pred_check_branch
      %49 = sbr.rel (0) target = $region13
    $region12: #{tpu_custom_call.1} parent=1 // pred_region
      %s51 = ssub.s32 128, 128
      %52 = vsyncadd [#allocation3], %s51
      %s54 = sshll.u32 [#allocation2], 4
      %s55 = int_to_ptr.vmem [resolvable:$true] %s54
      %57 = dma.vmem_to_hbm [thread:$0]  %s55, 128, %s2, [#allocation3]
    $region13: #{tpu_custom_call.1} parent=1 // pred_fallthru
      _
    // Predicated region
    $region14: #{tpu_custom_call.1} parent=1 // pred_check
      _
    $region15: #{tpu_custom_call.1} parent=1 // pred_check_branch
      %59 = sbr.rel (0) target = $region17
    $region16: #{tpu_custom_call.1} parent=1 // pred_region
      %60 = dma.done [#allocation3], 128
    $region17: #{tpu_custom_call.1} parent=1 // pred_fallthru
      _
    %61 = vsyncpa [#allocation3], 1

</llo_original>
